<compile_context>
chip_gen: v6e
topology: v6e:2x2x1
jax: 0.10.0
libtpu: 0.0.40
codegen_flags: <defaults>
</compile_context>

<pallas_src>
import math

import jax
import jax.numpy as jnp
import numpy as np
from jax import lax
from jax.experimental import pallas as pl
from jax.experimental.pallas import tpu as pltpu


def _largest_divisor_leq(n, cap):
    cap = int(max(1, min(n, cap)))
    for c in range(cap, 0, -1):
        if n % c == 0:
            return c
    return 1


def _hw_block_budget():
    """(per-block byte target, vmem_limit_bytes) derived from the chip's VMEM capacity."""
    vmem_cap = None
    try:
        info = pltpu.get_tpu_info()
        vmem_cap = getattr(info, "vmem_capacity_bytes", None)
    except Exception:
        vmem_cap = None
    if vmem_cap is None:
        vmem_cap = 64 * 1024 * 1024                 # conservative: v7x per-TC VMEM
    if vmem_cap >= 100 * 1024 * 1024:               # v5e / v6e: 128 MiB physical VMEM
        return 4 * 1024 * 1024, 64 * 1024 * 1024
    return 2 * 1024 * 1024, 40 * 1024 * 1024        # v7x: 64 MiB per TensorCore


def _pick_packing(S, D):
    """Smallest seq-packing factor G (dividing S) such that G*D is a multiple of 128."""
    if D % 128 == 0:
        return 1
    g_ideal = 128 // math.gcd(D, 128)
    for g in range(g_ideal, S + 1, g_ideal):
        if S % g == 0:
            return g
    # TODO(synk): pad S up to a multiple of g_ideal instead of falling back to L < 128.
    return _largest_divisor_leq(S, max(1, 128 // D))


def _pick_seq_tile(sp, lane, target_bytes, sub_mult):
    """Largest divisor of `sp` that is a legal sublane tile (multiple of sub_mult or == sp)
    and keeps one (tile, lane) f32 slab under target_bytes (best effort)."""
    cap = max(1, target_bytes // (lane * 4))
    best = None
    for c in range(1, sp + 1):
        if sp % c:
            continue
        if not (c % sub_mult == 0 or c == sp):
            continue
        if c <= cap:
            best = c
    if best is None:  # nothing legal fits the target; take the smallest legal tile
        for c in range(1, sp + 1):
            if sp % c == 0 and (c % sub_mult == 0 or c == sp):
                best = c
                break
    return best


def _pick_head_tile(bh, slab_bytes, target_bytes, whole_seq):
    cap = max(1, target_bytes // max(1, slab_bytes))
    cap = min(cap, 8)                       # flat 3-D block; keep head tile modest
    if whole_seq and bh > 1:
        cap = min(cap, max(1, bh // 2))     # keep >= 2 head blocks so both v7x TCs get work
    return _largest_divisor_leq(bh, cap)


def _make_rope_kernel(D, shift_lo, shift_hi):
    """Kernel over one (TB, TSp, L) block of q and k plus (TSp, L) f32 tables."""
    half = D // 2
    packed = shift_lo != shift_hi   # G > 1: seq positions packed along the lane axis

    def kernel(cos_ref, sin_ref, q_ref, k_ref, qo_ref, ko_ref):
        cos = cos_ref[...][None, :, :]        # (1, TSp, L) f32
        sin = sin_ref[...][None, :, :]        # (1, TSp, L) f32, rotate_half sign folded in

        if packed:
            tsp, L = cos_ref.shape
            lane = lax.broadcasted_iota(jnp.int32, (tsp, L), 1)
            is_lo = ((lane % D) < half)[None, :, :]   # lower half of each head-dim segment

        def apply_rope(x_ref, o_ref):
            x = x_ref[...].astype(jnp.float32)         # (TB, TSp, L)
            lo = pltpu.roll(x, shift_lo, axis=2)       # brings x[.., lane + D/2] to lane
            if packed:
                hi = pltpu.roll(x, shift_hi, axis=2)   # brings x[.., lane - D/2] to lane
                rot = jnp.where(is_lo, lo, hi)
            else:
                rot = lo                               # single cyclic roll is exact when L == D
            o_ref[...] = (x * cos + rot * sin).astype(o_ref.dtype)

        apply_rope(q_ref, qo_ref)
        apply_rope(k_ref, ko_ref)

    return kernel


def rotary_embedding(q, k, seq_len, *, base=10000):
    """Pallas equivalent of RotaryEmbedding.forward.

    q, k: [B, H, S, D].  Returns (q_rot, k_rot) with the same shape/dtype.
    """
    B, H, S, D = q.shape
    assert S == seq_len
    assert D % 2 == 0
    BH = B * H

    target_block_bytes, vmem_limit = _hw_block_budget()

    # --- lane packing: pack G consecutive seq positions so L = G*D is a multiple of 128.
    G = _pick_packing(S, D)
    L = G * D
    Sp = S // G

    # --- f32 tables (built once in plain JAX); rotate_half sign folded into one sin table.
    inv_freq = 1.0 / (base ** (jnp.arange(0, D, 2, dtype=jnp.float32) / D))   # (D/2,)
    t = jnp.arange(S, dtype=jnp.float32)                                      # (S,)
    freqs = t[:, None] * inv_freq[None, :]                                    # (S, D/2)
    emb = jnp.concatenate([freqs, freqs], axis=-1)                            # (S, D)
    sign = jnp.where(jnp.arange(D) < D // 2, -1.0, 1.0)[None, :]              # (1, D)
    cos_p = jnp.cos(emb).reshape(Sp, L)
    sin_s = (jnp.sin(emb) * sign).reshape(Sp, L)

    # --- free (transpose-less) packing of the data.
    qf = q.reshape(BH, Sp, L)
    kf = k.reshape(BH, Sp, L)

    # --- tile sizes: big, lane-dense blocks; dtype-aware sublane alignment.
    itemsize = q.dtype.itemsize
    sub_mult = 8 * max(1, 4 // itemsize)          # f32: 8, bf16: 16, int8/fp8: 32
    TSp = _pick_seq_tile(Sp, L, target_block_bytes, sub_mult)
    TB = _pick_head_tile(BH, TSp * L * 4, target_block_bytes, TSp == Sp)

    # Guarantee >= 2 grid points whenever possible (v7x has 2 TensorCores per chip).
    if (Sp // TSp) * (BH // TB) == 1:
        if BH > 1:
            TB = _largest_divisor_leq(BH, max(1, BH // 2))
        else:
            for c in range(TSp - 1, 0, -1):
                if Sp % c == 0 and c % sub_mult == 0:
                    TSp = c
                    break

    # Seq blocks OUTER (so table blocks stay resident across head blocks), heads inner.
    grid = (Sp // TSp, BH // TB)
    table_spec = pl.BlockSpec((TSp, L), lambda j, i: (j, 0))
    data_spec = pl.BlockSpec((TB, TSp, L), lambda j, i: (i, j, 0))

    shift_hi = D // 2                 # fetches partner at lane - D/2 (valid on upper half)
    shift_lo = (L - D // 2) % L       # fetches partner at lane + D/2 (valid on lower half)
    kernel = _make_rope_kernel(D, shift_lo, shift_hi)

    nelem = B * H * S * D
    cost = pl.CostEstimate(
        flops=8 * nelem,                                      # ~4 VPU ops/elem x (q, k)
        transcendentals=0,
        bytes_accessed=4 * nelem * itemsize + 2 * S * D * 4,  # q,k read + qo,ko write + 2 tables
    )

    qo, ko = pl.pallas_call(
        kernel,
        out_shape=(
            jax.ShapeDtypeStruct((BH, Sp, L), q.dtype),
            jax.ShapeDtypeStruct((BH, Sp, L), k.dtype),
        ),
        grid_spec=pltpu.PrefetchScalarGridSpec(
            num_scalar_prefetch=0,
            grid=grid,
            in_specs=[table_spec, table_spec, data_spec, data_spec],
            out_specs=[data_spec, data_spec],
        ),
        compiler_params=pltpu.CompilerParams(
            dimension_semantics=("parallel", "parallel"),
            vmem_limit_bytes=vmem_limit,
        ),
        cost_estimate=cost,
    )(cos_p, sin_s, qf, kf)

    return qo.reshape(B, H, S, D), ko.reshape(B, H, S, D)


def _reference(q, k, seq_len, base=10000):
    """Pure-JAX reference mirroring the PyTorch module exactly."""
    D = q.shape[-1]
    inv_freq = 1.0 / (base ** (jnp.arange(0, D, 2, dtype=jnp.float32) / D))
    t = jnp.arange(seq_len, dtype=jnp.float32)
    freqs = jnp.einsum("i,j->ij", t, inv_freq)
    emb = jnp.concatenate([freqs, freqs], axis=-1)
    cos = jnp.cos(emb)[None, None]
    sin = jnp.sin(emb)[None, None]

    def rot(x):
        half = D // 2
        return jnp.concatenate([-x[..., half:], x[..., :half]], axis=-1)

    return q * cos + rot(q) * sin, k * cos + rot(k) * sin


def _check(B, H, S, D, key):
    kq, kk = jax.random.split(key)
    q = jax.random.normal(kq, (B, H, S, D), dtype=jnp.float32)
    k = jax.random.normal(kk, (B, H, S, D), dtype=jnp.float32)

    q_rot, k_rot = rotary_embedding(q, k, S)
    jax.block_until_ready((q_rot, k_rot))

    q_ref, k_ref = _reference(q, k, S)
    np.testing.assert_allclose(np.asarray(q_rot), np.asarray(q_ref), rtol=1e-5, atol=1e-5)
    np.testing.assert_allclose(np.asarray(k_rot), np.asarray(k_ref), rtol=1e-5, atol=1e-5)


if __name__ == "__main__":
    key = jax.random.PRNGKey(0)
    k1, k2, k3 = jax.random.split(key, 3)
    # Primary small shape implied by the module: [batch, num_heads, seq_len, head_dim].
    _check(2, 4, 8, 32, k1)     # D=32  -> 4 seq positions packed per 128-lane row (packed path)
    _check(1, 2, 16, 64, k2)    # D=64  -> 2 seq positions packed per 128-lane row (packed path)
    _check(1, 2, 8, 128, k3)    # D=128 -> unpacked single-roll path
    print("KERNEL_OK")
</pallas_src>

<mosaic_0001>
module attributes {stable_mosaic.version = 11 : i64} {
  func.func @kernel(%arg0: i32, %arg1: i32, %arg2: memref<2x128xf32, #tpu.memory_space<vmem>>, %arg3: memref<2x128xf32, #tpu.memory_space<vmem>>, %arg4: memref<4x2x128xf32, #tpu.memory_space<vmem>>, %arg5: memref<4x2x128xf32, #tpu.memory_space<vmem>>, %arg6: memref<4x2x128xf32, #tpu.memory_space<vmem>>, %arg7: memref<4x2x128xf32, #tpu.memory_space<vmem>>) attributes {dimension_semantics = [#tpu.dimension_semantics<parallel>, #tpu.dimension_semantics<parallel>], iteration_bounds = array<i64: 1, 2>, scalar_prefetch = 0 : i64, scratch_operands = 0 : i64, tpu.core_type = #tpu.core_type<tc>, window_params = [{transform_indices = @transform_0, window_bounds = array<i64: 2, 128>}, {transform_indices = @transform_1, window_bounds = array<i64: 2, 128>}, {transform_indices = @transform_2, window_bounds = array<i64: 4, 2, 128>}, {transform_indices = @transform_3, window_bounds = array<i64: 4, 2, 128>}, {transform_indices = @transform_4, window_bounds = array<i64: 4, 2, 128>}, {transform_indices = @transform_5, window_bounds = array<i64: 4, 2, 128>}]} {
    %c0 = arith.constant 0 : index
    %c0_0 = arith.constant 0 : index
    %0 = vector.load %arg2[%c0, %c0_0] : memref<2x128xf32, #tpu.memory_space<vmem>>, vector<2x128xf32>
    %1 = vector.shape_cast %0 : vector<2x128xf32> to vector<1x2x128xf32>
    %c0_1 = arith.constant 0 : index
    %c0_2 = arith.constant 0 : index
    %2 = vector.load %arg3[%c0_1, %c0_2] : memref<2x128xf32, #tpu.memory_space<vmem>>, vector<2x128xf32>
    %3 = vector.shape_cast %2 : vector<2x128xf32> to vector<1x2x128xf32>
    %4 = tpu.iota {dimensions = array<i32: 1>} : vector<2x128xi32>
    %c32_i32 = arith.constant 32 : i32
    %c0_i32 = arith.constant 0 : i32
    %5 = arith.cmpi eq, %c32_i32, %c0_i32 : i32
    %c1_i32 = arith.constant 1 : i32
    %6 = arith.select %5, %c1_i32, %c32_i32 : i32
    %7 = vector.broadcast %6 : i32 to vector<2x128xi32>
    %8 = arith.remsi %4, %7 : vector<2x128xi32>
    %c0_i32_3 = arith.constant 0 : i32
    %9 = vector.broadcast %c0_i32_3 : i32 to vector<2x128xi32>
    %10 = arith.cmpi ne, %8, %9 : vector<2x128xi32>
    %c0_i32_4 = arith.constant 0 : i32
    %11 = vector.broadcast %c0_i32_4 : i32 to vector<2x128xi32>
    %12 = arith.cmpi slt, %8, %11 : vector<2x128xi32>
    %c0_i32_5 = arith.constant 0 : i32
    %13 = arith.cmpi slt, %6, %c0_i32_5 : i32
    %14 = vector.broadcast %13 : i1 to vector<2x128xi1>
    %15 = vector.broadcast %14 : vector<2x128xi1> to vector<2x128xi1>
    %16 = arith.xori %12, %15 : vector<2x128xi1>
    %17 = arith.andi %16, %10 : vector<2x128xi1>
    %18 = vector.broadcast %6 : i32 to vector<2x128xi32>
    %19 = arith.addi %8, %18 : vector<2x128xi32>
    %20 = arith.select %17, %19, %8 : vector<2x128xi1>, vector<2x128xi32>
    %c16_i32 = arith.constant 16 : i32
    %21 = vector.broadcast %c16_i32 : i32 to vector<2x128xi32>
    %22 = arith.cmpi slt, %20, %21 : vector<2x128xi32>
    %23 = vector.shape_cast %22 : vector<2x128xi1> to vector<1x2x128xi1>
    %c0_6 = arith.constant 0 : index
    %c0_7 = arith.constant 0 : index
    %c0_8 = arith.constant 0 : index
    %24 = vector.load %arg4[%c0_6, %c0_7, %c0_8] : memref<4x2x128xf32, #tpu.memory_space<vmem>>, vector<4x2x128xf32>
    %c112_i32 = arith.constant 112 : i32
    %25 = tpu.dynamic_rotate %24 by %c112_i32 dim 2 : vector<4x2x128xf32>, i32 -> vector<4x2x128xf32>
    %c16_i32_9 = arith.constant 16 : i32
    %26 = tpu.dynamic_rotate %24 by %c16_i32_9 dim 2 : vector<4x2x128xf32>, i32 -> vector<4x2x128xf32>
    %27 = vector.shape_cast %23 : vector<1x2x128xi1> to vector<1x2x128xi1>
    %28 = vector.broadcast %27 : vector<1x2x128xi1> to vector<4x2x128xi1>
    %29 = arith.select %28, %25, %26 : vector<4x2x128xi1>, vector<4x2x128xf32>
    %30 = vector.broadcast %1 : vector<1x2x128xf32> to vector<4x2x128xf32>
    %31 = arith.mulf %24, %30 : vector<4x2x128xf32>
    %32 = vector.broadcast %3 : vector<1x2x128xf32> to vector<4x2x128xf32>
    %33 = arith.mulf %29, %32 : vector<4x2x128xf32>
    %34 = arith.addf %31, %33 : vector<4x2x128xf32>
    %c0_10 = arith.constant 0 : index
    %c0_11 = arith.constant 0 : index
    %c0_12 = arith.constant 0 : index
    %35 = vector.load %arg6[%c0_10, %c0_11, %c0_12] : memref<4x2x128xf32, #tpu.memory_space<vmem>>, vector<4x2x128xf32>
    tpu.vector_store %arg6[%c0_10, %c0_11, %c0_12], %34 {strides = array<i32>} : memref<4x2x128xf32, #tpu.memory_space<vmem>>, vector<4x2x128xf32>,
    %c0_13 = arith.constant 0 : index
    %c0_14 = arith.constant 0 : index
    %c0_15 = arith.constant 0 : index
    %36 = vector.load %arg5[%c0_13, %c0_14, %c0_15] : memref<4x2x128xf32, #tpu.memory_space<vmem>>, vector<4x2x128xf32>
    %c112_i32_16 = arith.constant 112 : i32
    %37 = tpu.dynamic_rotate %36 by %c112_i32_16 dim 2 : vector<4x2x128xf32>, i32 -> vector<4x2x128xf32>
    %c16_i32_17 = arith.constant 16 : i32
    %38 = tpu.dynamic_rotate %36 by %c16_i32_17 dim 2 : vector<4x2x128xf32>, i32 -> vector<4x2x128xf32>
    %39 = vector.shape_cast %23 : vector<1x2x128xi1> to vector<1x2x128xi1>
    %40 = vector.broadcast %39 : vector<1x2x128xi1> to vector<4x2x128xi1>
    %41 = arith.select %40, %37, %38 : vector<4x2x128xi1>, vector<4x2x128xf32>
    %42 = vector.broadcast %1 : vector<1x2x128xf32> to vector<4x2x128xf32>
    %43 = arith.mulf %36, %42 : vector<4x2x128xf32>
    %44 = vector.broadcast %3 : vector<1x2x128xf32> to vector<4x2x128xf32>
    %45 = arith.mulf %41, %44 : vector<4x2x128xf32>
    %46 = arith.addf %43, %45 : vector<4x2x128xf32>
    %c0_18 = arith.constant 0 : index
    %c0_19 = arith.constant 0 : index
    %c0_20 = arith.constant 0 : index
    %47 = vector.load %arg7[%c0_18, %c0_19, %c0_20] : memref<4x2x128xf32, #tpu.memory_space<vmem>>, vector<4x2x128xf32>
    tpu.vector_store %arg7[%c0_18, %c0_19, %c0_20], %46 {strides = array<i32>} : memref<4x2x128xf32, #tpu.memory_space<vmem>>, vector<4x2x128xf32>,
    return
  }
  func.func @transform_0(%arg0: i32, %arg1: i32) -> (i32, i32) {
    %c0_i32 = arith.constant 0 : i32
    %c0_i32_0 = arith.constant 0 : i32
    return %arg0, %c0_i32 : i32, i32
  }
  func.func @transform_1(%arg0: i32, %arg1: i32) -> (i32, i32) {
    %c0_i32 = arith.constant 0 : i32
    %c0_i32_0 = arith.constant 0 : i32
    return %arg0, %c0_i32 : i32, i32
  }
  func.func @transform_2(%arg0: i32, %arg1: i32) -> (i32, i32, i32) {
    %c0_i32 = arith.constant 0 : i32
    %c0_i32_0 = arith.constant 0 : i32
    return %arg1, %arg0, %c0_i32 : i32, i32, i32
  }
  func.func @transform_3(%arg0: i32, %arg1: i32) -> (i32, i32, i32) {
    %c0_i32 = arith.constant 0 : i32
    %c0_i32_0 = arith.constant 0 : i32
    return %arg1, %arg0, %c0_i32 : i32, i32, i32
  }
  func.func @transform_4(%arg0: i32, %arg1: i32) -> (i32, i32, i32) {
    %c0_i32 = arith.constant 0 : i32
    %c0_i32_0 = arith.constant 0 : i32
    return %arg1, %arg0, %c0_i32 : i32, i32, i32
  }
  func.func @transform_5(%arg0: i32, %arg1: i32) -> (i32, i32, i32) {
    %c0_i32 = arith.constant 0 : i32
    %c0_i32_0 = arith.constant 0 : i32
    return %arg1, %arg0, %c0_i32 : i32, i32, i32
  }
}

</mosaic_0001>

<llo_original>
// kernel: tpu_custom_call.1
$region0: #{tpu_custom_call.1}
  #allocation0 [shape = 'u32[]', space=smem, size = 0x4, offset = 0x4, fixed_abs, tag = 'smem constant byte address 0x4 - core index']
  #allocation1 [shape = 'u32[144,128]{1,0:T(1,128)}', space=vmem, size = 0x12000, scoped, tag = 'internal scratch']
  %s0 = inlined_call_operand.hbm [shape: f32[2,128], index: 0, kind: input, shape index: {}]
  %s1 = inlined_call_operand.hbm [shape: f32[2,128], index: 1, kind: input, shape index: {}]
  %s2 = inlined_call_operand.hbm [shape: f32[8,2,128], index: 2, kind: input, shape index: {}]
  %s3 = inlined_call_operand.hbm [shape: f32[8,2,128], index: 3, kind: input, shape index: {}]
  %s4 = inlined_call_operand.hbm [shape: f32[8,2,128], index: 4, kind: output, shape index: {0}]
  %s5 = inlined_call_operand.hbm [shape: f32[8,2,128], index: 5, kind: output, shape index: {1}]
  %6 = xla_tuple %s4, %s5
  %s7 = sld [smem:[#allocation0]]
  $region73: #{tpu_custom_call.1} parent=0
    _
  %s9 = ssub.s32 1, %s7
  %s10 = scalar_select 0, %s9, %s7
  $region1: #{tpu_custom_call.1} parent=0
    #allocation2 [shape = 'u8[1024]{0}', space=vmem, size = 0x400, scoped, tag = 'input window, operand 0, single buffered']
    #allocation3 [shape = 's32[2]{0}', space=sflag, size = 0x8, scoped, tag = 'scoped memory for tpu_custom_call.1']
    #allocation4 [shape = 's32[2]{0}', space=sflag, size = 0x8, scoped, tag = 'scoped memory for tpu_custom_call.1']
    #allocation5 [shape = 'u8[1024]{0}', space=vmem, size = 0x400, scoped, tag = 'input window, operand 1, single buffered']
    #allocation6 [shape = 's32[1]{0}', space=sflag, size = 0x4, scoped, tag = 'scoped memory for tpu_custom_call.1']
    #allocation7 [shape = 'u8[8192]{0}', space=vmem, size = 0x2000, scoped, tag = 'input window, operand 2']
    #allocation8 [shape = 'u8[8192]{0}', space=vmem, size = 0x2000, scoped, tag = 'input window, operand 3']
    #allocation9 [shape = 'u8[8192]{0}', space=vmem, size = 0x2000, scoped, tag = 'output window, operand 0']
    #allocation10 [shape = 'u8[8192]{0}', space=vmem, size = 0x2000, scoped, tag = 'output window, operand 1']
    #allocation11 [shape = 's32[2]{0}', space=sflag, size = 0x8, scoped, tag = 'scoped memory for tpu_custom_call.1']
    %11 = vsyncpa [#allocation3], 0
    %12 = vsyncpa [#allocation6], 0
    %13 = vsyncpa [#allocation4], 0
    %s14 = scalar_lea.sflag [#allocation4], 1
    %15 = vsyncpa %s14, 0
    %16 = vsyncpa [#allocation11], 0
    %s17 = scalar_lea.sflag [#allocation11], 1
    %18 = vsyncpa %s17, 0
    loop: start=0, step=1, limit=4
    $region2: #{tpu_custom_call.1} parent=1 // loop_pre_header
      _
    $region3: #{tpu_custom_call.1} parent=1 // loop_header
      %s20 = sphi 0, %s24
      %p21 = scmp.ge.s32.totalorder %s20, 4
      %s27 = sphi 0, %s39
      %s28 = sphi 0, %s35
      %s29 = sphi 0, %s27
      %s30 = sphi 0, %s28
      %s31 = sphi 0, %s29
      %s32 = sphi 0, %s30
      %s42 = sphi 0, %s44
      %s45 = sphi 0, %s42
      %s46 = sphi 0, %s45
      %s62 = sphi 0, %s46
      %s68 = sphi 0, %s70
      %s71 = sphi 0, %s68
      %s72 = sphi 0, %s71
      %s88 = sphi 0, %s72
      %s96 = sphi 0, %s98
      %s99 = sphi 0, %s96
      %s100 = sphi 0, %s99
      %s116 = sphi 0, %s100
      %s124 = sphi 0, %s126
      %s127 = sphi 0, %s124
      %s128 = sphi 0, %s127
      %s144 = sphi 0, %s128
      %s152 = sphi 0, %s154
      %s155 = sphi 0, %s152
      %s156 = sphi 0, %s155
      %s172 = sphi 0, %s156
      %s180 = sphi 0, %s182
      %s183 = sphi 0, %s180
      %s184 = sphi 0, %s183
      %s200 = sphi 0, %s184
    $region4: #{tpu_custom_call.1} parent=1 // loop_header_branch
      %23 = sbr.rel (%p21) target = $region8
    $region5: #{tpu_custom_call.1} parent=1 // loop_body
      %s25 = ssub.s32 %s20, 1
      %s26 = ssub.s32 %s20, 2
      %s33 = sadd.s32 1, %s28
      %p34 = scmp.ge.s32.totalorder %s33, 2
      %s35 = scalar_select %p34, 0, %s33
      %s36 = sadd.s32 1, %s27
      %s37 = scalar_select %p34, %s36, %s27
      %p38 = scmp.ge.s32.totalorder %s37, 1
      %s39 = scalar_select %p38, 0, %s37
      %s40 = ssub.s32 %s27, %s39
      %p41 = scmp.eq.s32.totalorder %s40, 0
      %s43 = sadd.s32 %s42, 1
      %s44 = scalar_select %p41, %s42, %s43
      %p47 = pneg %p41
      %p48 = scmp.eq.s32.totalorder %s20, 1
      %p49 = por %p47, %p48
      %p50 = scmp.ne.s32.totalorder %s42, %s45
      %p51 = scmp.eq.s32.totalorder %s20, 0
      %p52 = por %p50, %p51
      %p53 = scmp.ne.s32.totalorder %s42, %s45
      %p54 = scmp.eq.s32.totalorder %s25, 1
      %p55 = por %p53, %p54
      %p56 = scmp.ne.s32.totalorder %s45, %s46
      %p57 = scmp.eq.s32.totalorder %s25, 0
      %p58 = por %p56, %p57
      %p59 = scmp.ne.s32.totalorder %s45, %s46
      %p60 = scmp.eq.s32.totalorder %s26, 1
      %p61 = por %p59, %p60
      %p63 = scmp.ne.s32.totalorder %s46, %s62
      %p64 = scmp.eq.s32.totalorder %s26, 0
      %p65 = por %p63, %p64
      %s66 = ssub.s32 %s27, %s39
      %p67 = scmp.eq.s32.totalorder %s66, 0
      %s69 = sadd.s32 %s68, 1
      %s70 = scalar_select %p67, %s68, %s69
      %p73 = pneg %p67
      %p74 = scmp.eq.s32.totalorder %s20, 1
      %p75 = por %p73, %p74
      %p76 = scmp.ne.s32.totalorder %s68, %s71
      %p77 = scmp.eq.s32.totalorder %s20, 0
      %p78 = por %p76, %p77
      %p79 = scmp.ne.s32.totalorder %s68, %s71
      %p80 = scmp.eq.s32.totalorder %s25, 1
      %p81 = por %p79, %p80
      %p82 = scmp.ne.s32.totalorder %s71, %s72
      %p83 = scmp.eq.s32.totalorder %s25, 0
      %p84 = por %p82, %p83
      %p85 = scmp.ne.s32.totalorder %s71, %s72
      %p86 = scmp.eq.s32.totalorder %s26, 1
      %p87 = por %p85, %p86
      %p89 = scmp.ne.s32.totalorder %s72, %s88
      %p90 = scmp.eq.s32.totalorder %s26, 0
      %p91 = por %p89, %p90
      %s92 = ssub.s32 %s28, %s35
      %s93 = ssub.s32 %s27, %s39
      %s94 = sor.u32 %s92, %s93
      %p95 = scmp.eq.s32.totalorder %s94, 0
      %s97 = sadd.s32 %s96, 1
      %s98 = scalar_select %p95, %s96, %s97
      %p101 = pneg %p95
      %p102 = scmp.eq.s32.totalorder %s20, 1
      %p103 = por %p101, %p102
      %p104 = scmp.ne.s32.totalorder %s96, %s99
      %p105 = scmp.eq.s32.totalorder %s20, 0
      %p106 = por %p104, %p105
      %p107 = scmp.ne.s32.totalorder %s96, %s99
      %p108 = scmp.eq.s32.totalorder %s25, 1
      %p109 = por %p107, %p108
      %p110 = scmp.ne.s32.totalorder %s99, %s100
      %p111 = scmp.eq.s32.totalorder %s25, 0
      %p112 = por %p110, %p111
      %p113 = scmp.ne.s32.totalorder %s99, %s100
      %p114 = scmp.eq.s32.totalorder %s26, 1
      %p115 = por %p113, %p114
      %p117 = scmp.ne.s32.totalorder %s100, %s116
      %p118 = scmp.eq.s32.totalorder %s26, 0
      %p119 = por %p117, %p118
      %s120 = ssub.s32 %s28, %s35
      %s121 = ssub.s32 %s27, %s39
      %s122 = sor.u32 %s120, %s121
      %p123 = scmp.eq.s32.totalorder %s122, 0
      %s125 = sadd.s32 %s124, 1
      %s126 = scalar_select %p123, %s124, %s125
      %p129 = pneg %p123
      %p130 = scmp.eq.s32.totalorder %s20, 1
      %p131 = por %p129, %p130
      %p132 = scmp.ne.s32.totalorder %s124, %s127
      %p133 = scmp.eq.s32.totalorder %s20, 0
      %p134 = por %p132, %p133
      %p135 = scmp.ne.s32.totalorder %s124, %s127
      %p136 = scmp.eq.s32.totalorder %s25, 1
      %p137 = por %p135, %p136
      %p138 = scmp.ne.s32.totalorder %s127, %s128
      %p139 = scmp.eq.s32.totalorder %s25, 0
      %p140 = por %p138, %p139
      %p141 = scmp.ne.s32.totalorder %s127, %s128
      %p142 = scmp.eq.s32.totalorder %s26, 1
      %p143 = por %p141, %p142
      %p145 = scmp.ne.s32.totalorder %s128, %s144
      %p146 = scmp.eq.s32.totalorder %s26, 0
      %p147 = por %p145, %p146
      %s148 = ssub.s32 %s28, %s35
      %s149 = ssub.s32 %s27, %s39
      %s150 = sor.u32 %s148, %s149
      %p151 = scmp.eq.s32.totalorder %s150, 0
      %s153 = sadd.s32 %s152, 1
      %s154 = scalar_select %p151, %s152, %s153
      %p157 = pneg %p151
      %p158 = scmp.eq.s32.totalorder %s20, 1
      %p159 = por %p157, %p158
      %p160 = scmp.ne.s32.totalorder %s152, %s155
      %p161 = scmp.eq.s32.totalorder %s20, 0
      %p162 = por %p160, %p161
      %p163 = scmp.ne.s32.totalorder %s152, %s155
      %p164 = scmp.eq.s32.totalorder %s25, 1
      %p165 = por %p163, %p164
      %p166 = scmp.ne.s32.totalorder %s155, %s156
      %p167 = scmp.eq.s32.totalorder %s25, 0
      %p168 = por %p166, %p167
      %p169 = scmp.ne.s32.totalorder %s155, %s156
      %p170 = scmp.eq.s32.totalorder %s26, 1
      %p171 = por %p169, %p170
      %p173 = scmp.ne.s32.totalorder %s156, %s172
      %p174 = scmp.eq.s32.totalorder %s26, 0
      %p175 = por %p173, %p174
      %s176 = ssub.s32 %s28, %s35
      %s177 = ssub.s32 %s27, %s39
      %s178 = sor.u32 %s176, %s177
      %p179 = scmp.eq.s32.totalorder %s178, 0
      %s181 = sadd.s32 %s180, 1
      %s182 = scalar_select %p179, %s180, %s181
      %p185 = pneg %p179
      %p186 = scmp.eq.s32.totalorder %s20, 1
      %p187 = por %p185, %p186
      %p188 = scmp.ne.s32.totalorder %s180, %s183
      %p189 = scmp.eq.s32.totalorder %s20, 0
      %p190 = por %p188, %p189
      %p191 = scmp.ne.s32.totalorder %s180, %s183
      %p192 = scmp.eq.s32.totalorder %s25, 1
      %p193 = por %p191, %p192
      %p194 = scmp.ne.s32.totalorder %s183, %s184
      %p195 = scmp.eq.s32.totalorder %s25, 0
      %p196 = por %p194, %p195
      %p197 = scmp.ne.s32.totalorder %s183, %s184
      %p198 = scmp.eq.s32.totalorder %s26, 1
      %p199 = por %p197, %p198
      %p201 = scmp.ne.s32.totalorder %s184, %s200
      %p202 = scmp.eq.s32.totalorder %s26, 0
      %p203 = por %p201, %p202
      %p204 = scmp.le.s32.totalorder 1, %s20
      %p205 = scmp.lt.s32.totalorder %s20, 3
      %p206 = pnand %p204, %p205
      %p207 = pneg %p206
      // Predicated region
      $region9: #{tpu_custom_call.1} parent=5 // pred_check
        _
      $region10: #{tpu_custom_call.1} parent=5 // pred_check_branch
        %209 = sbr.rel (%p206) target = $region12
      $region11: #{tpu_custom_call.1} parent=5 // pred_region
        %s210 = ssub.s32 %s20, 1
        // Predicated region
        $region13: #{tpu_custom_call.1} parent=11 // pred_check
          %p211 = pneg %p58
        $region14: #{tpu_custom_call.1} parent=11 // pred_check_branch
          %213 = sbr.rel (%p211) target = $region16
        $region15: #{tpu_custom_call.1} parent=11 // pred_region
          %s215 = ssub.s32 32, 32
          %216 = vsyncadd [#allocation3], %s215
          %s217 = smul.addr %s29, 32
          %s218 = scalar_lea.hbm %s0, %s217
          %s220 = sshll.u32 [#allocation2], 4
          %s221 = int_to_ptr.vmem [resolvable:$true] %s220
          %223 = dma.hbm_to_vmem [thread:$0]  %s218, 32, %s221, [#allocation3]
        $region16: #{tpu_custom_call.1} parent=11 // pred_fallthru
          _
        // Predicated region
        $region17: #{tpu_custom_call.1} parent=11 // pred_check
          %p224 = pneg %p84
        $region18: #{tpu_custom_call.1} parent=11 // pred_check_branch
          %226 = sbr.rel (%p224) target = $region20
        $region19: #{tpu_custom_call.1} parent=11 // pred_region
          %s228 = ssub.s32 32, 32
          %229 = vsyncadd [#allocation6], %s228
          %s230 = smul.addr %s29, 32
          %s231 = scalar_lea.hbm %s1, %s230
          %s233 = sshll.u32 [#allocation5], 4
          %s234 = int_to_ptr.vmem [resolvable:$true] %s233
          %236 = dma.hbm_to_vmem [thread:$0]  %s231, 32, %s234, [#allocation6]
        $region20: #{tpu_custom_call.1} parent=11 // pred_fallthru
          _
      $region12: #{tpu_custom_call.1} parent=5 // pred_fallthru
        _
      %p237 = scmp.lt.s32.totalorder %s20, 2
      // Predicated region
      $region21: #{tpu_custom_call.1} parent=5 // pred_check
        %p238 = pneg %p237
      $region22: #{tpu_custom_call.1} parent=5 // pred_check_branch
        %240 = sbr.rel (%p238) target = $region24
      $region23: #{tpu_custom_call.1} parent=5 // pred_region
        // Predicated region
        $region25: #{tpu_custom_call.1} parent=23 // pred_check
          %p241 = pneg %p106
        $region26: #{tpu_custom_call.1} parent=23 // pred_check_branch
          %243 = sbr.rel (%p241) target = $region28
        $region27: #{tpu_custom_call.1} parent=23 // pred_region
          %s244 = sand.u32 %s20, 1
          %s245 = scalar_lea.sflag [#allocation3], %s244
          %s246 = sand.u32 %s96, 1
          %s247 = smul.addr %s246, 8
          %s248 = scalar_lea.vmem [#allocation7], %s247
          %s249 = smul.u32 4, %s28
          %s251 = ssub.s32 128, 128
          %252 = vsyncadd %s245, %s251
          %s253 = sadd.s32 %s27, %s249
          %s254 = smul.addr %s253, 32
          %s255 = scalar_lea.hbm %s2, %s254
          %s256 = sshll.u32 %s248, 4
          %s257 = int_to_ptr.vmem [resolvable:$true] %s256
          %262 = dma.hbm_to_vmem [thread:$0]  %s255, 128, %s257, %s245, 32, 32, 2
        $region28: #{tpu_custom_call.1} parent=23 // pred_fallthru
          _
        // Predicated region
        $region29: #{tpu_custom_call.1} parent=23 // pred_check
          %p263 = pneg %p134
        $region30: #{tpu_custom_call.1} parent=23 // pred_check_branch
          %265 = sbr.rel (%p263) target = $region32
        $region31: #{tpu_custom_call.1} parent=23 // pred_region
          %s266 = sand.u32 %s20, 1
          %s267 = scalar_lea.sflag [#allocation3], %s266
          %s268 = sand.u32 %s124, 1
          %s269 = smul.addr %s268, 8
          %s270 = scalar_lea.vmem [#allocation8], %s269
          %s271 = smul.u32 4, %s28
          %s273 = ssub.s32 128, 128
          %274 = vsyncadd %s267, %s273
          %s275 = sadd.s32 %s27, %s271
          %s276 = smul.addr %s275, 32
          %s277 = scalar_lea.hbm %s3, %s276
          %s278 = sshll.u32 %s270, 4
          %s279 = int_to_ptr.vmem [resolvable:$true] %s278
          %284 = dma.hbm_to_vmem [thread:$0]  %s277, 128, %s279, %s267, 32, 32, 2
        $region32: #{tpu_custom_call.1} parent=23 // pred_fallthru
          _
      $region24: #{tpu_custom_call.1} parent=5 // pred_fallthru
        _
      %p285 = scmp.le.s32.totalorder 1, %s20
      %p286 = scmp.lt.s32.totalorder %s20, 3
      %p287 = pnand %p285, %p286
      %p288 = pneg %p287
      // Predicated region
      $region33: #{tpu_custom_call.1} parent=5 // pred_check
        _
      $region34: #{tpu_custom_call.1} parent=5 // pred_check_branch
        %290 = sbr.rel (%p287) target = $region36
      $region35: #{tpu_custom_call.1} parent=5 // pred_region
        %s291 = ssub.s32 %s20, 1
        // Predicated region
        $region37: #{tpu_custom_call.1} parent=35 // pred_check
          %p292 = pneg %p58
        $region38: #{tpu_custom_call.1} parent=35 // pred_check_branch
          %294 = sbr.rel (%p292) target = $region40
        $region39: #{tpu_custom_call.1} parent=35 // pred_region
          %295 = dma.done [#allocation3], 32
        $region40: #{tpu_custom_call.1} parent=35 // pred_fallthru
          _
        // Predicated region
        $region41: #{tpu_custom_call.1} parent=35 // pred_check
          %p296 = pneg %p84
        $region42: #{tpu_custom_call.1} parent=35 // pred_check_branch
          %298 = sbr.rel (%p296) target = $region44
        $region43: #{tpu_custom_call.1} parent=35 // pred_region
          %299 = dma.done [#allocation6], 32
        $region44: #{tpu_custom_call.1} parent=35 // pred_fallthru
          _
        %s300 = sand.u32 %s25, 1
        %s301 = scalar_lea.sflag [#allocation3], %s300
        %s302 = sand.u32 %s99, 1
        %s303 = smul.addr %s302, 8
        %s304 = scalar_lea.vmem [#allocation7], %s303
        // Predicated region
        $region45: #{tpu_custom_call.1} parent=35 // pred_check
          %p305 = pneg %p112
        $region46: #{tpu_custom_call.1} parent=35 // pred_check_branch
          %307 = sbr.rel (%p305) target = $region48
        $region47: #{tpu_custom_call.1} parent=35 // pred_region
          %308 = dma.done %s301, 128
        $region48: #{tpu_custom_call.1} parent=35 // pred_fallthru
          _
        %s309 = sand.u32 %s25, 1
        %s310 = scalar_lea.sflag [#allocation3], %s309
        %s311 = sand.u32 %s127, 1
        %s312 = smul.addr %s311, 8
        %s313 = scalar_lea.vmem [#allocation8], %s312
        // Predicated region
        $region49: #{tpu_custom_call.1} parent=35 // pred_check
          %p314 = pneg %p140
        $region50: #{tpu_custom_call.1} parent=35 // pred_check_branch
          %316 = sbr.rel (%p314) target = $region52
        $region51: #{tpu_custom_call.1} parent=35 // pred_region
          %317 = dma.done %s310, 128
        $region52: #{tpu_custom_call.1} parent=35 // pred_fallthru
          _
        %p318 = pneg %p58
        %p319 = pneg %p55
        %p320 = pneg %p84
        %p321 = pneg %p81
        %s322 = sand.u32 %s25, 1
        %s323 = scalar_lea.sflag [#allocation3], %s322
        %s324 = sand.u32 %s99, 1
        %s325 = smul.addr %s324, 8
        %s326 = scalar_lea.vmem [#allocation7], %s325
        %p327 = pneg %p112
        %p328 = pneg %p109
        %s329 = sand.u32 %s25, 1
        %s330 = scalar_lea.sflag [#allocation3], %s329
        %s331 = sand.u32 %s127, 1
        %s332 = smul.addr %s331, 8
        %s333 = scalar_lea.vmem [#allocation8], %s332
        %p334 = pneg %p140
        %p335 = pneg %p137
        %p336 = pneg %p168
        %p337 = pneg %p165
        %s338 = sand.u32 %s155, 1
        %s339 = scalar_lea.sflag [#allocation4], %s338
        %s340 = sand.u32 %s155, 1
        %s341 = smul.addr %s340, 8
        %s342 = scalar_lea.vmem [#allocation9], %s341
        %p343 = pneg %p196
        %p344 = pneg %p193
        %s345 = sand.u32 %s183, 1
        %s346 = scalar_lea.sflag [#allocation11], %s345
        %s347 = sand.u32 %s183, 1
        %s348 = smul.addr %s347, 8
        %s349 = scalar_lea.vmem [#allocation10], %s348
        %s350 = smul.u32 4, %s30
        %s351 = smul.u32 4, %s30
        %s352 = smul.u32 4, %s30
        %s353 = smul.u32 4, %s30
        %v354 = vld [vmem:[#allocation2] sm:$0x3]
        %v355 = vld [vmem:[#allocation5] sm:$0x3]
        %v356 = vlaneseq
        %v357 = vand.u32 %v356, 127
        %vm358 = vcmp.lt.s32.totalorder %v357, 0
        %v359 = vsub.s32 0, %v357
        %v360 = vsel %vm358, %v359, %v357
        %v361 = vshrl.u32 %v360, 5
        %v362 = vand.u32 %v360, 31
        %v363 = vsub.s32 0, %v362
        %v364 = vsel %vm358, %v363, %v362
        %vm365 = vcmp.ne.s32.totalorder %v364, 0
        %vm366 = vcmp.lt.s32.totalorder %v364, 0
        %vm367 = vmand %vm366, %vm365
        %v368 = vadd.s32 %v364, 32
        %v369 = vsel %vm367, %v368, %v364
        %vm370 = vcmp.lt.s32.totalorder %v369, 16
        %v371 = vld [vmem:[%s304] sm:$0x3]
        %v372 = vld [vmem:[%s304 + $0x2] sm:$0x3]
        %v373 = vld [vmem:[%s304 + $0x4] sm:$0x3]
        %v374 = vld [vmem:[%s304 + $0x6] sm:$0x3]
        %375 = vrot.lane.b32.xlu0 %v371, 112
        %v376 = vpop.permute.xlu0 %375
        %377 = vrot.lane.b32.xlu0 %v372, 112
        %v378 = vpop.permute.xlu0 %377
        %379 = vrot.lane.b32.xlu0 %v373, 112
        %v380 = vpop.permute.xlu0 %379
        %381 = vrot.lane.b32.xlu0 %v374, 112
        %v382 = vpop.permute.xlu0 %381
        %383 = vrot.lane.b32.xlu0 %v371, 16
        %v384 = vpop.permute.xlu0 %383
        %385 = vrot.lane.b32.xlu0 %v372, 16
        %v386 = vpop.permute.xlu0 %385
        %387 = vrot.lane.b32.xlu0 %v373, 16
        %v388 = vpop.permute.xlu0 %387
        %389 = vrot.lane.b32.xlu0 %v374, 16
        %v390 = vpop.permute.xlu0 %389
        %v391 = vsel %vm370, 1, 0
        %vm392 = vcmp.eq.s32.totalorder %v391, 1
        %v393 = vsel %vm392, %v376, %v384
        %v394 = vsel %vm392, %v378, %v386
        %v395 = vsel %vm392, %v380, %v388
        %v396 = vsel %vm392, %v382, %v390
        %v397 = vmul.f32 %v371, %v354
        %v398 = vmul.f32 %v372, %v354
        %v399 = vmul.f32 %v373, %v354
        %v400 = vmul.f32 %v374, %v354
        %v401 = vmul.f32 %v393, %v355
        %v402 = vmul.f32 %v394, %v355
        %v403 = vmul.f32 %v395, %v355
        %v404 = vmul.f32 %v396, %v355
        %v405 = vadd.f32 %v397, %v401
        %v406 = vadd.f32 %v398, %v402
        %v407 = vadd.f32 %v399, %v403
        %v408 = vadd.f32 %v400, %v404
        %409 = vst [vmem:[%s342] sm:$0x3] %v405
        %410 = vst [vmem:[%s342 + $0x2] sm:$0x3] %v406
        %411 = vst [vmem:[%s342 + $0x4] sm:$0x3] %v407
        %412 = vst [vmem:[%s342 + $0x6] sm:$0x3] %v408
        %v413 = vld [vmem:[%s313] sm:$0x3]
        %v414 = vld [vmem:[%s313 + $0x2] sm:$0x3]
        %v415 = vld [vmem:[%s313 + $0x4] sm:$0x3]
        %v416 = vld [vmem:[%s313 + $0x6] sm:$0x3]
        %417 = vrot.lane.b32.xlu0 %v413, 112
        %v418 = vpop.permute.xlu0 %417
        %419 = vrot.lane.b32.xlu0 %v414, 112
        %v420 = vpop.permute.xlu0 %419
        %421 = vrot.lane.b32.xlu0 %v415, 112
        %v422 = vpop.permute.xlu0 %421
        %423 = vrot.lane.b32.xlu0 %v416, 112
        %v424 = vpop.permute.xlu0 %423
        %425 = vrot.lane.b32.xlu0 %v413, 16
        %v426 = vpop.permute.xlu0 %425
        %427 = vrot.lane.b32.xlu0 %v414, 16
        %v428 = vpop.permute.xlu0 %427
        %429 = vrot.lane.b32.xlu0 %v415, 16
        %v430 = vpop.permute.xlu0 %429
        %431 = vrot.lane.b32.xlu0 %v416, 16
        %v432 = vpop.permute.xlu0 %431
        %v433 = vsel %vm392, %v418, %v426
        %v434 = vsel %vm392, %v420, %v428
        %v435 = vsel %vm392, %v422, %v430
        %v436 = vsel %vm392, %v424, %v432
        %v437 = vmul.f32 %v413, %v354
        %v438 = vmul.f32 %v414, %v354
        %v439 = vmul.f32 %v415, %v354
        %v440 = vmul.f32 %v416, %v354
        %v441 = vmul.f32 %v433, %v355
        %v442 = vmul.f32 %v434, %v355
        %v443 = vmul.f32 %v435, %v355
        %v444 = vmul.f32 %v436, %v355
        %v445 = vadd.f32 %v437, %v441
        %v446 = vadd.f32 %v438, %v442
        %v447 = vadd.f32 %v439, %v443
        %v448 = vadd.f32 %v440, %v444
        %449 = vst [vmem:[%s349] sm:$0x3] %v445
        %450 = vst [vmem:[%s349 + $0x2] sm:$0x3] %v446
        %451 = vst [vmem:[%s349 + $0x4] sm:$0x3] %v447
        %452 = vst [vmem:[%s349 + $0x6] sm:$0x3] %v448
        %s453 = sand.u32 %s155, 1
        %s454 = scalar_lea.sflag [#allocation4], %s453
        %s455 = sand.u32 %s155, 1
        %s456 = smul.addr %s455, 8
        %s457 = scalar_lea.vmem [#allocation9], %s456
        %s458 = sand.u32 %s183, 1
        %s459 = scalar_lea.sflag [#allocation11], %s458
        %s460 = sand.u32 %s183, 1
        %s461 = smul.addr %s460, 8
        %s462 = scalar_lea.vmem [#allocation10], %s461
        // Predicated region
        $region53: #{tpu_custom_call.1} parent=35 // pred_check
          %p463 = pneg %p165
        $region54: #{tpu_custom_call.1} parent=35 // pred_check_branch
          %465 = sbr.rel (%p463) target = $region56
        $region55: #{tpu_custom_call.1} parent=35 // pred_region
          %s466 = smul.u32 4, %s30
          %s468 = ssub.s32 128, 128
          %469 = vsyncadd %s454, %s468
          %s470 = sadd.s32 %s29, %s466
          %s471 = smul.addr %s470, 32
          %s472 = scalar_lea.hbm %s4, %s471
          %s473 = sshll.u32 %s457, 4
          %s474 = int_to_ptr.vmem [resolvable:$true] %s473
          %479 = dma.vmem_to_hbm [thread:$0]  %s474, 128, %s472, %s454, 32, 32, 2
        $region56: #{tpu_custom_call.1} parent=35 // pred_fallthru
          _
        // Predicated region
        $region57: #{tpu_custom_call.1} parent=35 // pred_check
          %p480 = pneg %p193
        $region58: #{tpu_custom_call.1} parent=35 // pred_check_branch
          %482 = sbr.rel (%p480) target = $region60
        $region59: #{tpu_custom_call.1} parent=35 // pred_region
          %s483 = smul.u32 4, %s30
          %s485 = ssub.s32 128, 128
          %486 = vsyncadd %s459, %s485
          %s487 = sadd.s32 %s29, %s483
          %s488 = smul.addr %s487, 32
          %s489 = scalar_lea.hbm %s5, %s488
          %s490 = sshll.u32 %s462, 4
          %s491 = int_to_ptr.vmem [resolvable:$true] %s490
          %496 = dma.vmem_to_hbm [thread:$0]  %s491, 128, %s489, %s459, 32, 32, 2
        $region60: #{tpu_custom_call.1} parent=35 // pred_fallthru
          _
      $region36: #{tpu_custom_call.1} parent=5 // pred_fallthru
        _
      %p497 = scmp.le.s32.totalorder 2, %s20
      // Predicated region
      $region61: #{tpu_custom_call.1} parent=5 // pred_check
        %p498 = pneg %p497
      $region62: #{tpu_custom_call.1} parent=5 // pred_check_branch
        %500 = sbr.rel (%p498) target = $region64
      $region63: #{tpu_custom_call.1} parent=5 // pred_region
        %s501 = ssub.s32 %s20, 2
        // Predicated region
        $region65: #{tpu_custom_call.1} parent=63 // pred_check
          %p502 = pneg %p171
        $region66: #{tpu_custom_call.1} parent=63 // pred_check_branch
          %504 = sbr.rel (%p502) target = $region68
        $region67: #{tpu_custom_call.1} parent=63 // pred_region
          %s505 = sand.u32 %s156, 1
          %s506 = scalar_lea.sflag [#allocation4], %s505
          %s507 = sand.u32 %s156, 1
          %s508 = smul.addr %s507, 8
          %s509 = scalar_lea.vmem [#allocation9], %s508
          %510 = dma.done %s506, 128
        $region68: #{tpu_custom_call.1} parent=63 // pred_fallthru
          _
        // Predicated region
        $region69: #{tpu_custom_call.1} parent=63 // pred_check
          %p511 = pneg %p199
        $region70: #{tpu_custom_call.1} parent=63 // pred_check_branch
          %513 = sbr.rel (%p511) target = $region72
        $region71: #{tpu_custom_call.1} parent=63 // pred_region
          %s514 = sand.u32 %s184, 1
          %s515 = scalar_lea.sflag [#allocation11], %s514
          %s516 = sand.u32 %s184, 1
          %s517 = smul.addr %s516, 8
          %s518 = scalar_lea.vmem [#allocation10], %s517
          %519 = dma.done %s515, 128
        $region72: #{tpu_custom_call.1} parent=63 // pred_fallthru
          _
      $region64: #{tpu_custom_call.1} parent=5 // pred_fallthru
        _
    $region6: #{tpu_custom_call.1} parent=1 // loop_footer
      %s24 = sadd.s32 1, %s20
    $region7: #{tpu_custom_call.1} parent=1 // loop_footer_branch
      %19 = sbr.rel target = $region3
    $region8: #{tpu_custom_call.1} parent=1 // loop_exit
      _
    %520 = vsyncpa [#allocation3], 1
    %s521 = scalar_lea.sflag [#allocation3], 1
    %522 = vsyncpa %s521, 1
    %523 = vsyncpa [#allocation6], 1
    %524 = vsyncpa [#allocation4], 1
    %s525 = scalar_lea.sflag [#allocation4], 1
    %526 = vsyncpa %s525, 1
    %527 = vsyncpa [#allocation11], 1
    %s528 = scalar_lea.sflag [#allocation11], 1
    %529 = vsyncpa %s528, 1

</llo_original>
